<compile_context>
chip_gen: v7x
topology: tpu7x:2x2x1
jax: 0.10.0
libtpu: 0.0.40
codegen_flags: <defaults>
</compile_context>

<pallas_src>
import functools

import jax
import jax.numpy as jnp
from jax.experimental import pallas as pl
from jax.experimental.pallas import tpu as pltpu


# ---------------------------------------------------------------------------
# Kernel
# ---------------------------------------------------------------------------
def _mean_pool_kernel(inv_s, x_ref, o_ref, acc_ref):
    # x_ref: (TB, TS, TD)   o_ref: (TB, TD)   acc_ref: (TB, TD) f32 scratch
    si = pl.program_id(2)  # sequence (reduction) axis

    @pl.when(si == 0)
    def _init():
        acc_ref[...] = jnp.zeros_like(acc_ref)

    # Sum this tile over its sequence-tile axis, accumulating in f32 without
    # materializing an f32 copy of the whole tile.
    acc_ref[...] += jnp.sum(x_ref[...], axis=1, dtype=jnp.float32)

    @pl.when(si == pl.num_programs(2) - 1)
    def _finalize():
        # inv_s is the TRUE 1/S (closed over from the wrapper), not 1/TS.
        o_ref[...] = (acc_ref[...] * inv_s).astype(o_ref.dtype)


# ---------------------------------------------------------------------------
# Tiling / budgeting helpers
# ---------------------------------------------------------------------------
def _vmem_budget_bytes():
    """Generation-aware scoped-VMEM budget (<= half of physical VMEM)."""
    try:
        cap = pltpu.get_tpu_info().vmem_capacity_bytes
    except Exception:  # pragma: no cover - conservative default
        cap = 64 << 20
    return int(min(cap // 2, 64 << 20))  # 32 MiB on v7x, 64 MiB on v5e/v6e


def _pick_tiles(B, S, D, itemsize, target_block_bytes=2 << 20):
    """Pick (TB, TS, TD) respecting (8, 128) tiling / sublane packing."""
    # sublane packing for the second-to-last dim of the input block (TS)
    pack = {4: 8, 2: 16, 1: 32}.get(itemsize, 8)

    # TB: multiple of 8 dividing B, else the full batch (full-dim is legal).
    tb = 8 if B % 8 == 0 else B

    # TD: multiple of 128 dividing D.  Shrink only if the batch axis alone
    # cannot provide >= 2 parallel grid steps (v7x has two TensorCores).
    td = D
    if B // tb < 2:
        for cand in (D // 2, D // 4):
            if cand >= 128 and cand % 128 == 0 and D % cand == 0:
                td = cand
                break

    # TS: multiple of `pack` dividing S, targeting ~target_block_bytes blocks.
    ts = S  # full-dim block is always legal
    if S * tb * td * itemsize > target_block_bytes and S % pack == 0:
        ts_max = max(pack, target_block_bytes // max(tb * td * itemsize, 1))
        best = None
        for cand in range(pack, S + 1, pack):
            if S % cand == 0 and cand <= ts_max:
                best = cand
        if best is not None:
            ts = best
    return tb, ts, td


# ---------------------------------------------------------------------------
# Wrapper (matches MeanPool.forward semantics)
# ---------------------------------------------------------------------------
def mean_pool(x, dim=1):
    """out = x.mean(dim).  Pallas path for 3-D transformer activations."""
    if x.ndim != 3:
        # TODO(synk): only the 3-D transformer activation case is tiled
        # natively; other ranks use XLA's fused reduce (same semantics).
        return jnp.mean(x, axis=dim)

    dim = dim % 3
    if dim != 1:
        keep = [a for a in range(3) if a != dim]
        x = jnp.transpose(x, (keep[0], dim, keep[1]))

    B, S, D = x.shape
    itemsize = x.dtype.itemsize
    nbytes = B * S * D * itemsize

    # Small-shape / non-lane-dense fast path: a pallas_call launch plus masked
    # partial stores loses to XLA's fused reduce here on every generation.
    if (D % 128 != 0) or (nbytes < (256 << 10)) or not jnp.issubdtype(
        x.dtype, jnp.floating
    ):
        return jnp.mean(x, axis=1).astype(x.dtype)

    budget = _vmem_budget_bytes()
    tb, ts, td = _pick_tiles(B, S, D, itemsize)

    # Safety: double-buffered input block + double-buffered output block +
    # f32 accumulator must fit the scoped budget with headroom.
    per_step = (
        2 * tb * ts * td * itemsize + 2 * tb * td * itemsize + tb * td * 4
    )
    if per_step > budget:
        return jnp.mean(x, axis=1).astype(x.dtype)

    grid = (B // tb, D // td, S // ts)
    kernel = functools.partial(_mean_pool_kernel, float(1.0 / S))

    return pl.pallas_call(
        kernel,
        out_shape=jax.ShapeDtypeStruct((B, D), x.dtype),
        grid_spec=pltpu.PrefetchScalarGridSpec(
            num_scalar_prefetch=0,
            grid=grid,
            in_specs=[
                pl.BlockSpec((tb, ts, td), lambda bi, di, si: (bi, si, di)),
            ],
            out_specs=pl.BlockSpec((tb, td), lambda bi, di, si: (bi, di)),
            scratch_shapes=[pltpu.VMEM((tb, td), jnp.float32)],
        ),
        compiler_params=pltpu.CompilerParams(
            dimension_semantics=("parallel", "parallel", "arbitrary"),
            vmem_limit_bytes=budget,
        ),
        cost_estimate=pl.CostEstimate(
            flops=B * S * D,
            transcendentals=0,
            bytes_accessed=B * S * D * itemsize + B * D * itemsize,
        ),
    )(x)


def mean_pool_ref(x, dim=1):
    return jnp.mean(x.astype(jnp.float32), axis=dim).astype(x.dtype)


# ---------------------------------------------------------------------------
# Self-test
# ---------------------------------------------------------------------------
if __name__ == "__main__":
    key = jax.random.PRNGKey(0)

    # 1) Tiny transformer-style shape from the module's typical use
    #    (batch=2, seq=8, d_model=32).  D < 128 -> XLA fast path (by design).
    k1, k2, k3 = jax.random.split(key, 3)
    x_small = jax.random.normal(k1, (2, 8, 32), dtype=jnp.float32)
    out_small = jax.block_until_ready(mean_pool(x_small, dim=1))
    assert out_small.shape == (2, 32)
    assert jnp.allclose(out_small, mean_pool_ref(x_small), atol=1e-5, rtol=1e-5)

    # 2) f32 case that exercises the Pallas path (lane-dense D, >=2 parallel
    #    grid steps even though B//TB == 1 thanks to D-tiling).
    x_f32 = jax.random.normal(k2, (8, 256, 256), dtype=jnp.float32)
    out_f32 = jax.block_until_ready(mean_pool(x_f32, dim=1))
    assert out_f32.shape == (8, 256)
    assert jnp.allclose(out_f32, mean_pool_ref(x_f32), atol=1e-5, rtol=1e-5)

    # 3) bf16 case that exercises the tiled sequence-reduction accumulator
    #    (grid has multiple "arbitrary" steps along S) with f32 accumulation.
    x_bf16 = jax.random.normal(k3, (16, 1024, 256), dtype=jnp.bfloat16)
    out_bf16 = jax.block_until_ready(mean_pool(x_bf16, dim=1))
    assert out_bf16.shape == (16, 256)
    ref_bf16 = mean_pool_ref(x_bf16)
    assert jnp.allclose(
        out_bf16.astype(jnp.float32),
        ref_bf16.astype(jnp.float32),
        atol=2e-2,
        rtol=2e-2,
    ), "bf16 mismatch vs reference"

    print("KERNEL_OK")
</pallas_src>

<mosaic_0001>
module attributes {stable_mosaic.version = 11 : i64} {
  func.func @_mean_pool_kernel(%arg0: i32, %arg1: i32, %arg2: i32, %arg3: memref<8x256x128xf32, #tpu.memory_space<vmem>>, %arg4: memref<8x128xf32, #tpu.memory_space<vmem>>, %arg5: memref<8x128xf32, #tpu.memory_space<vmem>>) attributes {dimension_semantics = [#tpu.dimension_semantics<parallel>, #tpu.dimension_semantics<parallel>, #tpu.dimension_semantics<arbitrary>], iteration_bounds = array<i64: 1, 2, 1>, scalar_prefetch = 0 : i64, scratch_operands = 1 : i64, tpu.core_type = #tpu.core_type<tc>, window_params = [{transform_indices = @transform_0, window_bounds = array<i64: 8, 256, 128>}, {transform_indices = @transform_1, window_bounds = array<i64: 8, 128>}]} {
    %c0_i32 = arith.constant 0 : i32
    %0 = arith.cmpi eq, %arg2, %c0_i32 : i32
    %1 = arith.extui %0 : i1 to i32
    %c0_i32_0 = arith.constant 0 : i32
    %2 = arith.cmpi ne, %1, %c0_i32_0 : i32
    scf.if %2 {
      %cst_9 = arith.constant 0.000000e+00 : f32
      %11 = vector.broadcast %cst_9 : f32 to vector<8x128xf32>
      %c0_10 = arith.constant 0 : index
      %c0_11 = arith.constant 0 : index
      %12 = vector.load %arg5[%c0_10, %c0_11] : memref<8x128xf32, #tpu.memory_space<vmem>>, vector<8x128xf32>
      tpu.vector_store %arg5[%c0_10, %c0_11], %11 {strides = array<i32>} : memref<8x128xf32, #tpu.memory_space<vmem>>, vector<8x128xf32>,
    } else {
    }
    %c0 = arith.constant 0 : index
    %c0_1 = arith.constant 0 : index
    %3 = vector.load %arg5[%c0, %c0_1] : memref<8x128xf32, #tpu.memory_space<vmem>>, vector<8x128xf32>
    %c0_2 = arith.constant 0 : index
    %c0_3 = arith.constant 0 : index
    %c0_4 = arith.constant 0 : index
    %4 = vector.load %arg3[%c0_2, %c0_3, %c0_4] : memref<8x256x128xf32, #tpu.memory_space<vmem>>, vector<8x256x128xf32>
    %cst = arith.constant dense<0.000000e+00> : vector<8x128xf32>
    %5 = vector.multi_reduction <add>, %4, %cst [1] : vector<8x256x128xf32> to vector<8x128xf32>
    %6 = arith.addf %3, %5 : vector<8x128xf32>
    %c0_5 = arith.constant 0 : index
    %c0_6 = arith.constant 0 : index
    %7 = vector.load %arg5[%c0_5, %c0_6] : memref<8x128xf32, #tpu.memory_space<vmem>>, vector<8x128xf32>
    tpu.vector_store %arg5[%c0_5, %c0_6], %6 {strides = array<i32>} : memref<8x128xf32, #tpu.memory_space<vmem>>, vector<8x128xf32>,
    %c0_i32_7 = arith.constant 0 : i32
    %8 = arith.cmpi eq, %arg2, %c0_i32_7 : i32
    %9 = arith.extui %8 : i1 to i32
    %c0_i32_8 = arith.constant 0 : i32
    %10 = arith.cmpi ne, %9, %c0_i32_8 : i32
    scf.if %10 {
      %c0_9 = arith.constant 0 : index
      %c0_10 = arith.constant 0 : index
      %11 = vector.load %arg5[%c0_9, %c0_10] : memref<8x128xf32, #tpu.memory_space<vmem>>, vector<8x128xf32>
      %cst_11 = arith.constant 3.906250e-03 : f32
      %12 = vector.broadcast %cst_11 : f32 to vector<8x128xf32>
      %13 = arith.mulf %11, %12 : vector<8x128xf32>
      %c0_12 = arith.constant 0 : index
      %c0_13 = arith.constant 0 : index
      %14 = vector.load %arg4[%c0_12, %c0_13] : memref<8x128xf32, #tpu.memory_space<vmem>>, vector<8x128xf32>
      tpu.vector_store %arg4[%c0_12, %c0_13], %13 {strides = array<i32>} : memref<8x128xf32, #tpu.memory_space<vmem>>, vector<8x128xf32>,
    } else {
    }
    return
  }
  func.func @transform_0(%arg0: i32, %arg1: i32, %arg2: i32) -> (i32, i32, i32) {
    %c0_i32 = arith.constant 0 : i32
    return %arg0, %arg2, %arg1 : i32, i32, i32
  }
  func.func @transform_1(%arg0: i32, %arg1: i32, %arg2: i32) -> (i32, i32) {
    %c0_i32 = arith.constant 0 : i32
    return %arg0, %arg1 : i32, i32
  }
}

</mosaic_0001>

<llo_original>
// kernel: tpu_custom_call.1
$region0: #{tpu_custom_call.1}
  #allocation0 [shape = 'u32[]', space=smem, size = 0x4, offset = 0x4, fixed_abs, tag = 'smem constant byte address 0x4 - core index']
  #allocation1 [shape = 'u32[144,128]{1,0:T(1,128)}', space=vmem, size = 0x12000, scoped, tag = 'internal scratch']
  #allocation2 [shape = 'f32[8,128]{1,0:T(8,128)}', space=vmem, size = 0x1000, scoped, tag = 'scratch operand']
  %s0 = inlined_call_operand.hbm [shape: f32[8,256,256], index: 0, kind: input, shape index: {}]
  %s1 = inlined_call_operand.hbm [shape: f32[8,256], index: 1, kind: output, shape index: {}]
  %s2 = sld [smem:[#allocation0]]
  $region49: #{tpu_custom_call.1} parent=0
    _
  %s4 = ssub.s32 1, %s2
  %s5 = scalar_select 0, %s4, %s2
  $region1: #{tpu_custom_call.1} parent=0
    #allocation3 [shape = 'u8[2097152]{0}', space=vmem, size = 0x200000, scoped, tag = 'input window, operand 0']
    #allocation4 [shape = 's32[2]{0}', space=sflag, size = 0x8, scoped, tag = 'scoped memory for tpu_custom_call.1']
    #allocation5 [shape = 's32[2]{0}', space=sflag, size = 0x8, scoped, tag = 'scoped memory for tpu_custom_call.1']
    #allocation6 [shape = 'u8[8192]{0}', space=vmem, size = 0x2000, scoped, tag = 'output window, operand 0']
    %6 = vsyncpa [#allocation4], 0
    %s7 = scalar_lea.sflag [#allocation4], 1
    %8 = vsyncpa %s7, 0
    %9 = vsyncpa [#allocation5], 0
    %s10 = scalar_lea.sflag [#allocation5], 1
    %11 = vsyncpa %s10, 0
    loop: start=0, step=1, limit=4
    $region2: #{tpu_custom_call.1} parent=1 // loop_pre_header
      _
    $region3: #{tpu_custom_call.1} parent=1 // loop_header
      %s13 = sphi 0, %s17
      %p14 = scmp.ge.s32.totalorder %s13, 4
      %s20 = sphi 0, %s39
      %s21 = sphi 0, %s35
      %s22 = sphi 0, %s31
      %s23 = sphi 0, %s20
      %s24 = sphi 0, %s21
      %s25 = sphi 0, %s22
      %s26 = sphi 0, %s23
      %s27 = sphi 0, %s24
      %s28 = sphi 0, %s25
      %s46 = sphi 0, %s48
      %s49 = sphi 0, %s46
      %s50 = sphi 0, %s49
      %s66 = sphi 0, %s50
      %s74 = sphi 0, %s76
      %s77 = sphi 0, %s74
      %s78 = sphi 0, %s77
      %s94 = sphi 0, %s78
    $region4: #{tpu_custom_call.1} parent=1 // loop_header_branch
      %16 = sbr.rel (%p14) target = $region8
    $region5: #{tpu_custom_call.1} parent=1 // loop_body
      %s18 = ssub.s32 %s13, 1
      %s19 = ssub.s32 %s13, 2
      %s29 = sadd.s32 1, %s22
      %p30 = scmp.ge.s32.totalorder %s29, 1
      %s31 = scalar_select %p30, 0, %s29
      %s32 = sadd.s32 1, %s21
      %s33 = scalar_select %p30, %s32, %s21
      %p34 = scmp.ge.s32.totalorder %s33, 2
      %s35 = scalar_select %p34, 0, %s33
      %s36 = sadd.s32 1, %s20
      %s37 = scalar_select %p34, %s36, %s20
      %p38 = scmp.ge.s32.totalorder %s37, 1
      %s39 = scalar_select %p38, 0, %s37
      %s40 = ssub.s32 %s20, %s39
      %s41 = ssub.s32 %s22, %s31
      %s42 = sor.u32 %s40, %s41
      %s43 = ssub.s32 %s21, %s35
      %s44 = sor.u32 %s42, %s43
      %p45 = scmp.eq.s32.totalorder %s44, 0
      %s47 = sadd.s32 %s46, 1
      %s48 = scalar_select %p45, %s46, %s47
      %p51 = pneg %p45
      %p52 = scmp.eq.s32.totalorder %s13, 1
      %p53 = por %p51, %p52
      %p54 = scmp.ne.s32.totalorder %s46, %s49
      %p55 = scmp.eq.s32.totalorder %s13, 0
      %p56 = por %p54, %p55
      %p57 = scmp.ne.s32.totalorder %s46, %s49
      %p58 = scmp.eq.s32.totalorder %s18, 1
      %p59 = por %p57, %p58
      %p60 = scmp.ne.s32.totalorder %s49, %s50
      %p61 = scmp.eq.s32.totalorder %s18, 0
      %p62 = por %p60, %p61
      %p63 = scmp.ne.s32.totalorder %s49, %s50
      %p64 = scmp.eq.s32.totalorder %s19, 1
      %p65 = por %p63, %p64
      %p67 = scmp.ne.s32.totalorder %s50, %s66
      %p68 = scmp.eq.s32.totalorder %s19, 0
      %p69 = por %p67, %p68
      %s70 = ssub.s32 %s20, %s39
      %s71 = ssub.s32 %s21, %s35
      %s72 = sor.u32 %s70, %s71
      %p73 = scmp.eq.s32.totalorder %s72, 0
      %s75 = sadd.s32 %s74, 1
      %s76 = scalar_select %p73, %s74, %s75
      %p79 = pneg %p73
      %p80 = scmp.eq.s32.totalorder %s13, 1
      %p81 = por %p79, %p80
      %p82 = scmp.ne.s32.totalorder %s74, %s77
      %p83 = scmp.eq.s32.totalorder %s13, 0
      %p84 = por %p82, %p83
      %p85 = scmp.ne.s32.totalorder %s74, %s77
      %p86 = scmp.eq.s32.totalorder %s18, 1
      %p87 = por %p85, %p86
      %p88 = scmp.ne.s32.totalorder %s77, %s78
      %p89 = scmp.eq.s32.totalorder %s18, 0
      %p90 = por %p88, %p89
      %p91 = scmp.ne.s32.totalorder %s77, %s78
      %p92 = scmp.eq.s32.totalorder %s19, 1
      %p93 = por %p91, %p92
      %p95 = scmp.ne.s32.totalorder %s78, %s94
      %p96 = scmp.eq.s32.totalorder %s19, 0
      %p97 = por %p95, %p96
      %p98 = scmp.le.s32.totalorder 1, %s13
      %p99 = scmp.lt.s32.totalorder %s13, 3
      %p100 = pnand %p98, %p99
      %p101 = pneg %p100
      // Predicated region
      $region9: #{tpu_custom_call.1} parent=5 // pred_check
        _
      $region10: #{tpu_custom_call.1} parent=5 // pred_check_branch
        %103 = sbr.rel (%p100) target = $region12
      $region11: #{tpu_custom_call.1} parent=5 // pred_region
        %s104 = ssub.s32 %s13, 1
      $region12: #{tpu_custom_call.1} parent=5 // pred_fallthru
        _
      %p105 = scmp.lt.s32.totalorder %s13, 2
      // Predicated region
      $region13: #{tpu_custom_call.1} parent=5 // pred_check
        %p106 = pneg %p105
      $region14: #{tpu_custom_call.1} parent=5 // pred_check_branch
        %108 = sbr.rel (%p106) target = $region16
      $region15: #{tpu_custom_call.1} parent=5 // pred_region
        // Predicated region
        $region17: #{tpu_custom_call.1} parent=15 // pred_check
          %p109 = pneg %p56
        $region18: #{tpu_custom_call.1} parent=15 // pred_check_branch
          %111 = sbr.rel (%p109) target = $region20
        $region19: #{tpu_custom_call.1} parent=15 // pred_region
          %s112 = sand.u32 %s46, 1
          %s113 = scalar_lea.sflag [#allocation4], %s112
          %s114 = sand.u32 %s46, 1
          %s115 = smul.addr %s114, 2048
          %s116 = scalar_lea.vmem [#allocation3], %s115
          %s117 = smul.u32 8, %s20
          %s118 = smul.u32 32, %s22
          %s120 = ssub.s32 32768, 32768
          %121 = vsyncadd %s113, %s120
          %s122 = smul.addr %s118, 2
          %s123 = sadd.s32 %s21, %s122
          %s124 = smul.addr %s117, 64
          %s125 = sadd.s32 %s123, %s124
          %s126 = smul.addr %s125, 128
          %s127 = scalar_lea.hbm %s0, %s126
          %s128 = sshll.u32 %s116, 4
          %s129 = int_to_ptr.vmem [resolvable:$true] %s128
          %134 = dma.hbm_to_vmem [thread:$0]  %s127, 32768, %s129, %s113, 256, 128, 8
        $region20: #{tpu_custom_call.1} parent=15 // pred_fallthru
          _
      $region16: #{tpu_custom_call.1} parent=5 // pred_fallthru
        _
      %p135 = scmp.le.s32.totalorder 1, %s13
      %p136 = scmp.lt.s32.totalorder %s13, 3
      %p137 = pnand %p135, %p136
      %p138 = pneg %p137
      // Predicated region
      $region21: #{tpu_custom_call.1} parent=5 // pred_check
        _
      $region22: #{tpu_custom_call.1} parent=5 // pred_check_branch
        %140 = sbr.rel (%p137) target = $region24
      $region23: #{tpu_custom_call.1} parent=5 // pred_region
        %s141 = ssub.s32 %s13, 1
        %s142 = sand.u32 %s49, 1
        %s143 = scalar_lea.sflag [#allocation4], %s142
        %s144 = sand.u32 %s49, 1
        %s145 = smul.addr %s144, 2048
        %s146 = scalar_lea.vmem [#allocation3], %s145
        // Predicated region
        $region25: #{tpu_custom_call.1} parent=23 // pred_check
          %p147 = pneg %p62
        $region26: #{tpu_custom_call.1} parent=23 // pred_check_branch
          %149 = sbr.rel (%p147) target = $region28
        $region27: #{tpu_custom_call.1} parent=23 // pred_region
          %150 = dma.done %s143, 32768
        $region28: #{tpu_custom_call.1} parent=23 // pred_fallthru
          _
        %s151 = sand.u32 %s49, 1
        %s152 = scalar_lea.sflag [#allocation4], %s151
        %s153 = sand.u32 %s49, 1
        %s154 = smul.addr %s153, 2048
        %s155 = scalar_lea.vmem [#allocation3], %s154
        %p156 = pneg %p62
        %p157 = pneg %p59
        %p158 = pneg %p90
        %p159 = pneg %p87
        %s160 = sand.u32 %s77, 1
        %s161 = scalar_lea.sflag [#allocation5], %s160
        %s162 = sand.u32 %s77, 1
        %s163 = smul.addr %s162, 8
        %s164 = scalar_lea.vmem [#allocation6], %s163
        %s165 = smul.u32 8, %s23
        %s166 = smul.u32 32, %s25
        %p167 = scmp.eq.s32.totalorder %s25, 0
        // Predicated region
        $region29: #{tpu_custom_call.1} parent=23 // pred_check
          %p168 = pneg %p167
        $region30: #{tpu_custom_call.1} parent=23 // pred_check_branch
          %170 = sbr.rel (%p168) target = $region32
        $region31: #{tpu_custom_call.1} parent=23 // pred_region
          %171 = vst [vmem:[#allocation2] sm:$0xff] 0.0
        $region32: #{tpu_custom_call.1} parent=23 // pred_fallthru
          _
        %v172 = vld [vmem:[#allocation2] sm:$0xff]
        %v173 = vld [vmem:[%s146] sm:$0xff]
        %v174 = vld [vmem:[%s146 + $0x8] sm:$0xff]
        %v175 = vld [vmem:[%s146 + $0x10] sm:$0xff]
        %v176 = vld [vmem:[%s146 + $0x18] sm:$0xff]
        %v177 = vld [vmem:[%s146 + $0x20] sm:$0xff]
        %v178 = vld [vmem:[%s146 + $0x28] sm:$0xff]
        %v179 = vld [vmem:[%s146 + $0x30] sm:$0xff]
        %v180 = vld [vmem:[%s146 + $0x38] sm:$0xff]
        %v181 = vld [vmem:[%s146 + $0x40] sm:$0xff]
        %v182 = vld [vmem:[%s146 + $0x48] sm:$0xff]
        %v183 = vld [vmem:[%s146 + $0x50] sm:$0xff]
        %v184 = vld [vmem:[%s146 + $0x58] sm:$0xff]
        %v185 = vld [vmem:[%s146 + $0x60] sm:$0xff]
        %v186 = vld [vmem:[%s146 + $0x68] sm:$0xff]
        %v187 = vld [vmem:[%s146 + $0x70] sm:$0xff]
        %v188 = vld [vmem:[%s146 + $0x78] sm:$0xff]
        %v189 = vld [vmem:[%s146 + $0x80] sm:$0xff]
        %v190 = vld [vmem:[%s146 + $0x88] sm:$0xff]
        %v191 = vld [vmem:[%s146 + $0x90] sm:$0xff]
        %v192 = vld [vmem:[%s146 + $0x98] sm:$0xff]
        %v193 = vld [vmem:[%s146 + $0xa0] sm:$0xff]
        %v194 = vld [vmem:[%s146 + $0xa8] sm:$0xff]
        %v195 = vld [vmem:[%s146 + $0xb0] sm:$0xff]
        %v196 = vld [vmem:[%s146 + $0xb8] sm:$0xff]
        %v197 = vld [vmem:[%s146 + $0xc0] sm:$0xff]
        %v198 = vld [vmem:[%s146 + $0xc8] sm:$0xff]
        %v199 = vld [vmem:[%s146 + $0xd0] sm:$0xff]
        %v200 = vld [vmem:[%s146 + $0xd8] sm:$0xff]
        %v201 = vld [vmem:[%s146 + $0xe0] sm:$0xff]
        %v202 = vld [vmem:[%s146 + $0xe8] sm:$0xff]
        %v203 = vld [vmem:[%s146 + $0xf0] sm:$0xff]
        %v204 = vld [vmem:[%s146 + $0xf8] sm:$0xff]
        %v205 = vld [vmem:[%s146 + $0x100] sm:$0xff]
        %v206 = vld [vmem:[%s146 + $0x108] sm:$0xff]
        %v207 = vld [vmem:[%s146 + $0x110] sm:$0xff]
        %v208 = vld [vmem:[%s146 + $0x118] sm:$0xff]
        %v209 = vld [vmem:[%s146 + $0x120] sm:$0xff]
        %v210 = vld [vmem:[%s146 + $0x128] sm:$0xff]
        %v211 = vld [vmem:[%s146 + $0x130] sm:$0xff]
        %v212 = vld [vmem:[%s146 + $0x138] sm:$0xff]
        %v213 = vld [vmem:[%s146 + $0x140] sm:$0xff]
        %v214 = vld [vmem:[%s146 + $0x148] sm:$0xff]
        %v215 = vld [vmem:[%s146 + $0x150] sm:$0xff]
        %v216 = vld [vmem:[%s146 + $0x158] sm:$0xff]
        %v217 = vld [vmem:[%s146 + $0x160] sm:$0xff]
        %v218 = vld [vmem:[%s146 + $0x168] sm:$0xff]
        %v219 = vld [vmem:[%s146 + $0x170] sm:$0xff]
        %v220 = vld [vmem:[%s146 + $0x178] sm:$0xff]
        %v221 = vld [vmem:[%s146 + $0x180] sm:$0xff]
        %v222 = vld [vmem:[%s146 + $0x188] sm:$0xff]
        %v223 = vld [vmem:[%s146 + $0x190] sm:$0xff]
        %v224 = vld [vmem:[%s146 + $0x198] sm:$0xff]
        %v225 = vld [vmem:[%s146 + $0x1a0] sm:$0xff]
        %v226 = vld [vmem:[%s146 + $0x1a8] sm:$0xff]
        %v227 = vld [vmem:[%s146 + $0x1b0] sm:$0xff]
        %v228 = vld [vmem:[%s146 + $0x1b8] sm:$0xff]
        %v229 = vld [vmem:[%s146 + $0x1c0] sm:$0xff]
        %v230 = vld [vmem:[%s146 + $0x1c8] sm:$0xff]
        %v231 = vld [vmem:[%s146 + $0x1d0] sm:$0xff]
        %v232 = vld [vmem:[%s146 + $0x1d8] sm:$0xff]
        %v233 = vld [vmem:[%s146 + $0x1e0] sm:$0xff]
        %v234 = vld [vmem:[%s146 + $0x1e8] sm:$0xff]
        %v235 = vld [vmem:[%s146 + $0x1f0] sm:$0xff]
        %v236 = vld [vmem:[%s146 + $0x1f8] sm:$0xff]
        %v237 = vld [vmem:[%s146 + $0x200] sm:$0xff]
        %v238 = vld [vmem:[%s146 + $0x208] sm:$0xff]
        %v239 = vld [vmem:[%s146 + $0x210] sm:$0xff]
        %v240 = vld [vmem:[%s146 + $0x218] sm:$0xff]
        %v241 = vld [vmem:[%s146 + $0x220] sm:$0xff]
        %v242 = vld [vmem:[%s146 + $0x228] sm:$0xff]
        %v243 = vld [vmem:[%s146 + $0x230] sm:$0xff]
        %v244 = vld [vmem:[%s146 + $0x238] sm:$0xff]
        %v245 = vld [vmem:[%s146 + $0x240] sm:$0xff]
        %v246 = vld [vmem:[%s146 + $0x248] sm:$0xff]
        %v247 = vld [vmem:[%s146 + $0x250] sm:$0xff]
        %v248 = vld [vmem:[%s146 + $0x258] sm:$0xff]
        %v249 = vld [vmem:[%s146 + $0x260] sm:$0xff]
        %v250 = vld [vmem:[%s146 + $0x268] sm:$0xff]
        %v251 = vld [vmem:[%s146 + $0x270] sm:$0xff]
        %v252 = vld [vmem:[%s146 + $0x278] sm:$0xff]
        %v253 = vld [vmem:[%s146 + $0x280] sm:$0xff]
        %v254 = vld [vmem:[%s146 + $0x288] sm:$0xff]
        %v255 = vld [vmem:[%s146 + $0x290] sm:$0xff]
        %v256 = vld [vmem:[%s146 + $0x298] sm:$0xff]
        %v257 = vld [vmem:[%s146 + $0x2a0] sm:$0xff]
        %v258 = vld [vmem:[%s146 + $0x2a8] sm:$0xff]
        %v259 = vld [vmem:[%s146 + $0x2b0] sm:$0xff]
        %v260 = vld [vmem:[%s146 + $0x2b8] sm:$0xff]
        %v261 = vld [vmem:[%s146 + $0x2c0] sm:$0xff]
        %v262 = vld [vmem:[%s146 + $0x2c8] sm:$0xff]
        %v263 = vld [vmem:[%s146 + $0x2d0] sm:$0xff]
        %v264 = vld [vmem:[%s146 + $0x2d8] sm:$0xff]
        %v265 = vld [vmem:[%s146 + $0x2e0] sm:$0xff]
        %v266 = vld [vmem:[%s146 + $0x2e8] sm:$0xff]
        %v267 = vld [vmem:[%s146 + $0x2f0] sm:$0xff]
        %v268 = vld [vmem:[%s146 + $0x2f8] sm:$0xff]
        %v269 = vld [vmem:[%s146 + $0x300] sm:$0xff]
        %v270 = vld [vmem:[%s146 + $0x308] sm:$0xff]
        %v271 = vld [vmem:[%s146 + $0x310] sm:$0xff]
        %v272 = vld [vmem:[%s146 + $0x318] sm:$0xff]
        %v273 = vld [vmem:[%s146 + $0x320] sm:$0xff]
        %v274 = vld [vmem:[%s146 + $0x328] sm:$0xff]
        %v275 = vld [vmem:[%s146 + $0x330] sm:$0xff]
        %v276 = vld [vmem:[%s146 + $0x338] sm:$0xff]
        %v277 = vld [vmem:[%s146 + $0x340] sm:$0xff]
        %v278 = vld [vmem:[%s146 + $0x348] sm:$0xff]
        %v279 = vld [vmem:[%s146 + $0x350] sm:$0xff]
        %v280 = vld [vmem:[%s146 + $0x358] sm:$0xff]
        %v281 = vld [vmem:[%s146 + $0x360] sm:$0xff]
        %v282 = vld [vmem:[%s146 + $0x368] sm:$0xff]
        %v283 = vld [vmem:[%s146 + $0x370] sm:$0xff]
        %v284 = vld [vmem:[%s146 + $0x378] sm:$0xff]
        %v285 = vld [vmem:[%s146 + $0x380] sm:$0xff]
        %v286 = vld [vmem:[%s146 + $0x388] sm:$0xff]
        %v287 = vld [vmem:[%s146 + $0x390] sm:$0xff]
        %v288 = vld [vmem:[%s146 + $0x398] sm:$0xff]
        %v289 = vld [vmem:[%s146 + $0x3a0] sm:$0xff]
        %v290 = vld [vmem:[%s146 + $0x3a8] sm:$0xff]
        %v291 = vld [vmem:[%s146 + $0x3b0] sm:$0xff]
        %v292 = vld [vmem:[%s146 + $0x3b8] sm:$0xff]
        %v293 = vld [vmem:[%s146 + $0x3c0] sm:$0xff]
        %v294 = vld [vmem:[%s146 + $0x3c8] sm:$0xff]
        %v295 = vld [vmem:[%s146 + $0x3d0] sm:$0xff]
        %v296 = vld [vmem:[%s146 + $0x3d8] sm:$0xff]
        %v297 = vld [vmem:[%s146 + $0x3e0] sm:$0xff]
        %v298 = vld [vmem:[%s146 + $0x3e8] sm:$0xff]
        %v299 = vld [vmem:[%s146 + $0x3f0] sm:$0xff]
        %v300 = vld [vmem:[%s146 + $0x3f8] sm:$0xff]
        %v301 = vld [vmem:[%s146 + $0x400] sm:$0xff]
        %v302 = vld [vmem:[%s146 + $0x408] sm:$0xff]
        %v303 = vld [vmem:[%s146 + $0x410] sm:$0xff]
        %v304 = vld [vmem:[%s146 + $0x418] sm:$0xff]
        %v305 = vld [vmem:[%s146 + $0x420] sm:$0xff]
        %v306 = vld [vmem:[%s146 + $0x428] sm:$0xff]
        %v307 = vld [vmem:[%s146 + $0x430] sm:$0xff]
        %v308 = vld [vmem:[%s146 + $0x438] sm:$0xff]
        %v309 = vld [vmem:[%s146 + $0x440] sm:$0xff]
        %v310 = vld [vmem:[%s146 + $0x448] sm:$0xff]
        %v311 = vld [vmem:[%s146 + $0x450] sm:$0xff]
        %v312 = vld [vmem:[%s146 + $0x458] sm:$0xff]
        %v313 = vld [vmem:[%s146 + $0x460] sm:$0xff]
        %v314 = vld [vmem:[%s146 + $0x468] sm:$0xff]
        %v315 = vld [vmem:[%s146 + $0x470] sm:$0xff]
        %v316 = vld [vmem:[%s146 + $0x478] sm:$0xff]
        %v317 = vld [vmem:[%s146 + $0x480] sm:$0xff]
        %v318 = vld [vmem:[%s146 + $0x488] sm:$0xff]
        %v319 = vld [vmem:[%s146 + $0x490] sm:$0xff]
        %v320 = vld [vmem:[%s146 + $0x498] sm:$0xff]
        %v321 = vld [vmem:[%s146 + $0x4a0] sm:$0xff]
        %v322 = vld [vmem:[%s146 + $0x4a8] sm:$0xff]
        %v323 = vld [vmem:[%s146 + $0x4b0] sm:$0xff]
        %v324 = vld [vmem:[%s146 + $0x4b8] sm:$0xff]
        %v325 = vld [vmem:[%s146 + $0x4c0] sm:$0xff]
        %v326 = vld [vmem:[%s146 + $0x4c8] sm:$0xff]
        %v327 = vld [vmem:[%s146 + $0x4d0] sm:$0xff]
        %v328 = vld [vmem:[%s146 + $0x4d8] sm:$0xff]
        %v329 = vld [vmem:[%s146 + $0x4e0] sm:$0xff]
        %v330 = vld [vmem:[%s146 + $0x4e8] sm:$0xff]
        %v331 = vld [vmem:[%s146 + $0x4f0] sm:$0xff]
        %v332 = vld [vmem:[%s146 + $0x4f8] sm:$0xff]
        %v333 = vld [vmem:[%s146 + $0x500] sm:$0xff]
        %v334 = vld [vmem:[%s146 + $0x508] sm:$0xff]
        %v335 = vld [vmem:[%s146 + $0x510] sm:$0xff]
        %v336 = vld [vmem:[%s146 + $0x518] sm:$0xff]
        %v337 = vld [vmem:[%s146 + $0x520] sm:$0xff]
        %v338 = vld [vmem:[%s146 + $0x528] sm:$0xff]
        %v339 = vld [vmem:[%s146 + $0x530] sm:$0xff]
        %v340 = vld [vmem:[%s146 + $0x538] sm:$0xff]
        %v341 = vld [vmem:[%s146 + $0x540] sm:$0xff]
        %v342 = vld [vmem:[%s146 + $0x548] sm:$0xff]
        %v343 = vld [vmem:[%s146 + $0x550] sm:$0xff]
        %v344 = vld [vmem:[%s146 + $0x558] sm:$0xff]
        %v345 = vld [vmem:[%s146 + $0x560] sm:$0xff]
        %v346 = vld [vmem:[%s146 + $0x568] sm:$0xff]
        %v347 = vld [vmem:[%s146 + $0x570] sm:$0xff]
        %v348 = vld [vmem:[%s146 + $0x578] sm:$0xff]
        %v349 = vld [vmem:[%s146 + $0x580] sm:$0xff]
        %v350 = vld [vmem:[%s146 + $0x588] sm:$0xff]
        %v351 = vld [vmem:[%s146 + $0x590] sm:$0xff]
        %v352 = vld [vmem:[%s146 + $0x598] sm:$0xff]
        %v353 = vld [vmem:[%s146 + $0x5a0] sm:$0xff]
        %v354 = vld [vmem:[%s146 + $0x5a8] sm:$0xff]
        %v355 = vld [vmem:[%s146 + $0x5b0] sm:$0xff]
        %v356 = vld [vmem:[%s146 + $0x5b8] sm:$0xff]
        %v357 = vld [vmem:[%s146 + $0x5c0] sm:$0xff]
        %v358 = vld [vmem:[%s146 + $0x5c8] sm:$0xff]
        %v359 = vld [vmem:[%s146 + $0x5d0] sm:$0xff]
        %v360 = vld [vmem:[%s146 + $0x5d8] sm:$0xff]
        %v361 = vld [vmem:[%s146 + $0x5e0] sm:$0xff]
        %v362 = vld [vmem:[%s146 + $0x5e8] sm:$0xff]
        %v363 = vld [vmem:[%s146 + $0x5f0] sm:$0xff]
        %v364 = vld [vmem:[%s146 + $0x5f8] sm:$0xff]
        %v365 = vld [vmem:[%s146 + $0x600] sm:$0xff]
        %v366 = vld [vmem:[%s146 + $0x608] sm:$0xff]
        %v367 = vld [vmem:[%s146 + $0x610] sm:$0xff]
        %v368 = vld [vmem:[%s146 + $0x618] sm:$0xff]
        %v369 = vld [vmem:[%s146 + $0x620] sm:$0xff]
        %v370 = vld [vmem:[%s146 + $0x628] sm:$0xff]
        %v371 = vld [vmem:[%s146 + $0x630] sm:$0xff]
        %v372 = vld [vmem:[%s146 + $0x638] sm:$0xff]
        %v373 = vld [vmem:[%s146 + $0x640] sm:$0xff]
        %v374 = vld [vmem:[%s146 + $0x648] sm:$0xff]
        %v375 = vld [vmem:[%s146 + $0x650] sm:$0xff]
        %v376 = vld [vmem:[%s146 + $0x658] sm:$0xff]
        %v377 = vld [vmem:[%s146 + $0x660] sm:$0xff]
        %v378 = vld [vmem:[%s146 + $0x668] sm:$0xff]
        %v379 = vld [vmem:[%s146 + $0x670] sm:$0xff]
        %v380 = vld [vmem:[%s146 + $0x678] sm:$0xff]
        %v381 = vld [vmem:[%s146 + $0x680] sm:$0xff]
        %v382 = vld [vmem:[%s146 + $0x688] sm:$0xff]
        %v383 = vld [vmem:[%s146 + $0x690] sm:$0xff]
        %v384 = vld [vmem:[%s146 + $0x698] sm:$0xff]
        %v385 = vld [vmem:[%s146 + $0x6a0] sm:$0xff]
        %v386 = vld [vmem:[%s146 + $0x6a8] sm:$0xff]
        %v387 = vld [vmem:[%s146 + $0x6b0] sm:$0xff]
        %v388 = vld [vmem:[%s146 + $0x6b8] sm:$0xff]
        %v389 = vld [vmem:[%s146 + $0x6c0] sm:$0xff]
        %v390 = vld [vmem:[%s146 + $0x6c8] sm:$0xff]
        %v391 = vld [vmem:[%s146 + $0x6d0] sm:$0xff]
        %v392 = vld [vmem:[%s146 + $0x6d8] sm:$0xff]
        %v393 = vld [vmem:[%s146 + $0x6e0] sm:$0xff]
        %v394 = vld [vmem:[%s146 + $0x6e8] sm:$0xff]
        %v395 = vld [vmem:[%s146 + $0x6f0] sm:$0xff]
        %v396 = vld [vmem:[%s146 + $0x6f8] sm:$0xff]
        %v397 = vld [vmem:[%s146 + $0x700] sm:$0xff]
        %v398 = vld [vmem:[%s146 + $0x708] sm:$0xff]
        %v399 = vld [vmem:[%s146 + $0x710] sm:$0xff]
        %v400 = vld [vmem:[%s146 + $0x718] sm:$0xff]
        %v401 = vld [vmem:[%s146 + $0x720] sm:$0xff]
        %v402 = vld [vmem:[%s146 + $0x728] sm:$0xff]
        %v403 = vld [vmem:[%s146 + $0x730] sm:$0xff]
        %v404 = vld [vmem:[%s146 + $0x738] sm:$0xff]
        %v405 = vld [vmem:[%s146 + $0x740] sm:$0xff]
        %v406 = vld [vmem:[%s146 + $0x748] sm:$0xff]
        %v407 = vld [vmem:[%s146 + $0x750] sm:$0xff]
        %v408 = vld [vmem:[%s146 + $0x758] sm:$0xff]
        %v409 = vld [vmem:[%s146 + $0x760] sm:$0xff]
        %v410 = vld [vmem:[%s146 + $0x768] sm:$0xff]
        %v411 = vld [vmem:[%s146 + $0x770] sm:$0xff]
        %v412 = vld [vmem:[%s146 + $0x778] sm:$0xff]
        %v413 = vld [vmem:[%s146 + $0x780] sm:$0xff]
        %v414 = vld [vmem:[%s146 + $0x788] sm:$0xff]
        %v415 = vld [vmem:[%s146 + $0x790] sm:$0xff]
        %v416 = vld [vmem:[%s146 + $0x798] sm:$0xff]
        %v417 = vld [vmem:[%s146 + $0x7a0] sm:$0xff]
        %v418 = vld [vmem:[%s146 + $0x7a8] sm:$0xff]
        %v419 = vld [vmem:[%s146 + $0x7b0] sm:$0xff]
        %v420 = vld [vmem:[%s146 + $0x7b8] sm:$0xff]
        %v421 = vld [vmem:[%s146 + $0x7c0] sm:$0xff]
        %v422 = vld [vmem:[%s146 + $0x7c8] sm:$0xff]
        %v423 = vld [vmem:[%s146 + $0x7d0] sm:$0xff]
        %v424 = vld [vmem:[%s146 + $0x7d8] sm:$0xff]
        %v425 = vld [vmem:[%s146 + $0x7e0] sm:$0xff]
        %v426 = vld [vmem:[%s146 + $0x7e8] sm:$0xff]
        %v427 = vld [vmem:[%s146 + $0x7f0] sm:$0xff]
        %v428 = vld [vmem:[%s146 + $0x7f8] sm:$0xff]
        %v429 = vadd.f32 %v173, %v174
        %v430 = vadd.f32 %v429, %v175
        %v431 = vadd.f32 %v430, %v176
        %v432 = vadd.f32 %v431, %v177
        %v433 = vadd.f32 %v432, %v178
        %v434 = vadd.f32 %v433, %v179
        %v435 = vadd.f32 %v434, %v180
        %v436 = vadd.f32 %v435, %v181
        %v437 = vadd.f32 %v436, %v182
        %v438 = vadd.f32 %v437, %v183
        %v439 = vadd.f32 %v438, %v184
        %v440 = vadd.f32 %v439, %v185
        %v441 = vadd.f32 %v440, %v186
        %v442 = vadd.f32 %v441, %v187
        %v443 = vadd.f32 %v442, %v188
        %v444 = vadd.f32 %v443, %v189
        %v445 = vadd.f32 %v444, %v190
        %v446 = vadd.f32 %v445, %v191
        %v447 = vadd.f32 %v446, %v192
        %v448 = vadd.f32 %v447, %v193
        %v449 = vadd.f32 %v448, %v194
        %v450 = vadd.f32 %v449, %v195
        %v451 = vadd.f32 %v450, %v196
        %v452 = vadd.f32 %v451, %v197
        %v453 = vadd.f32 %v452, %v198
        %v454 = vadd.f32 %v453, %v199
        %v455 = vadd.f32 %v454, %v200
        %v456 = vadd.f32 %v455, %v201
        %v457 = vadd.f32 %v456, %v202
        %v458 = vadd.f32 %v457, %v203
        %v459 = vadd.f32 %v458, %v204
        %v460 = vrot.slane %v459, 4
        %v461 = vadd.f32 %v459, %v460
        %v462 = vrot.slane %v461, 2
        %v463 = vadd.f32 %v461, %v462
        %v464 = vrot.slane %v463, 1
        %v465 = vadd.f32 %v463, %v464
        %v466 = vadd.f32 %v205, %v206
        %v467 = vadd.f32 %v466, %v207
        %v468 = vadd.f32 %v467, %v208
        %v469 = vadd.f32 %v468, %v209
        %v470 = vadd.f32 %v469, %v210
        %v471 = vadd.f32 %v470, %v211
        %v472 = vadd.f32 %v471, %v212
        %v473 = vadd.f32 %v472, %v213
        %v474 = vadd.f32 %v473, %v214
        %v475 = vadd.f32 %v474, %v215
        %v476 = vadd.f32 %v475, %v216
        %v477 = vadd.f32 %v476, %v217
        %v478 = vadd.f32 %v477, %v218
        %v479 = vadd.f32 %v478, %v219
        %v480 = vadd.f32 %v479, %v220
        %v481 = vadd.f32 %v480, %v221
        %v482 = vadd.f32 %v481, %v222
        %v483 = vadd.f32 %v482, %v223
        %v484 = vadd.f32 %v483, %v224
        %v485 = vadd.f32 %v484, %v225
        %v486 = vadd.f32 %v485, %v226
        %v487 = vadd.f32 %v486, %v227
        %v488 = vadd.f32 %v487, %v228
        %v489 = vadd.f32 %v488, %v229
        %v490 = vadd.f32 %v489, %v230
        %v491 = vadd.f32 %v490, %v231
        %v492 = vadd.f32 %v491, %v232
        %v493 = vadd.f32 %v492, %v233
        %v494 = vadd.f32 %v493, %v234
        %v495 = vadd.f32 %v494, %v235
        %v496 = vadd.f32 %v495, %v236
        %v497 = vrot.slane %v496, 4
        %v498 = vadd.f32 %v496, %v497
        %v499 = vrot.slane %v498, 2
        %v500 = vadd.f32 %v498, %v499
        %v501 = vrot.slane %v500, 1
        %v502 = vadd.f32 %v500, %v501
        %v503 = vadd.f32 %v237, %v238
        %v504 = vadd.f32 %v503, %v239
        %v505 = vadd.f32 %v504, %v240
        %v506 = vadd.f32 %v505, %v241
        %v507 = vadd.f32 %v506, %v242
        %v508 = vadd.f32 %v507, %v243
        %v509 = vadd.f32 %v508, %v244
        %v510 = vadd.f32 %v509, %v245
        %v511 = vadd.f32 %v510, %v246
        %v512 = vadd.f32 %v511, %v247
        %v513 = vadd.f32 %v512, %v248
        %v514 = vadd.f32 %v513, %v249
        %v515 = vadd.f32 %v514, %v250
        %v516 = vadd.f32 %v515, %v251
        %v517 = vadd.f32 %v516, %v252
        %v518 = vadd.f32 %v517, %v253
        %v519 = vadd.f32 %v518, %v254
        %v520 = vadd.f32 %v519, %v255
        %v521 = vadd.f32 %v520, %v256
        %v522 = vadd.f32 %v521, %v257
        %v523 = vadd.f32 %v522, %v258
        %v524 = vadd.f32 %v523, %v259
        %v525 = vadd.f32 %v524, %v260
        %v526 = vadd.f32 %v525, %v261
        %v527 = vadd.f32 %v526, %v262
        %v528 = vadd.f32 %v527, %v263
        %v529 = vadd.f32 %v528, %v264
        %v530 = vadd.f32 %v529, %v265
        %v531 = vadd.f32 %v530, %v266
        %v532 = vadd.f32 %v531, %v267
        %v533 = vadd.f32 %v532, %v268
        %v534 = vrot.slane %v533, 4
        %v535 = vadd.f32 %v533, %v534
        %v536 = vrot.slane %v535, 2
        %v537 = vadd.f32 %v535, %v536
        %v538 = vrot.slane %v537, 1
        %v539 = vadd.f32 %v537, %v538
        %v540 = vadd.f32 %v269, %v270
        %v541 = vadd.f32 %v540, %v271
        %v542 = vadd.f32 %v541, %v272
        %v543 = vadd.f32 %v542, %v273
        %v544 = vadd.f32 %v543, %v274
        %v545 = vadd.f32 %v544, %v275
        %v546 = vadd.f32 %v545, %v276
        %v547 = vadd.f32 %v546, %v277
        %v548 = vadd.f32 %v547, %v278
        %v549 = vadd.f32 %v548, %v279
        %v550 = vadd.f32 %v549, %v280
        %v551 = vadd.f32 %v550, %v281
        %v552 = vadd.f32 %v551, %v282
        %v553 = vadd.f32 %v552, %v283
        %v554 = vadd.f32 %v553, %v284
        %v555 = vadd.f32 %v554, %v285
        %v556 = vadd.f32 %v555, %v286
        %v557 = vadd.f32 %v556, %v287
        %v558 = vadd.f32 %v557, %v288
        %v559 = vadd.f32 %v558, %v289
        %v560 = vadd.f32 %v559, %v290
        %v561 = vadd.f32 %v560, %v291
        %v562 = vadd.f32 %v561, %v292
        %v563 = vadd.f32 %v562, %v293
        %v564 = vadd.f32 %v563, %v294
        %v565 = vadd.f32 %v564, %v295
        %v566 = vadd.f32 %v565, %v296
        %v567 = vadd.f32 %v566, %v297
        %v568 = vadd.f32 %v567, %v298
        %v569 = vadd.f32 %v568, %v299
        %v570 = vadd.f32 %v569, %v300
        %v571 = vrot.slane %v570, 4
        %v572 = vadd.f32 %v570, %v571
        %v573 = vrot.slane %v572, 2
        %v574 = vadd.f32 %v572, %v573
        %v575 = vrot.slane %v574, 1
        %v576 = vadd.f32 %v574, %v575
        %v577 = vadd.f32 %v301, %v302
        %v578 = vadd.f32 %v577, %v303
        %v579 = vadd.f32 %v578, %v304
        %v580 = vadd.f32 %v579, %v305
        %v581 = vadd.f32 %v580, %v306
        %v582 = vadd.f32 %v581, %v307
        %v583 = vadd.f32 %v582, %v308
        %v584 = vadd.f32 %v583, %v309
        %v585 = vadd.f32 %v584, %v310
        %v586 = vadd.f32 %v585, %v311
        %v587 = vadd.f32 %v586, %v312
        %v588 = vadd.f32 %v587, %v313
        %v589 = vadd.f32 %v588, %v314
        %v590 = vadd.f32 %v589, %v315
        %v591 = vadd.f32 %v590, %v316
        %v592 = vadd.f32 %v591, %v317
        %v593 = vadd.f32 %v592, %v318
        %v594 = vadd.f32 %v593, %v319
        %v595 = vadd.f32 %v594, %v320
        %v596 = vadd.f32 %v595, %v321
        %v597 = vadd.f32 %v596, %v322
        %v598 = vadd.f32 %v597, %v323
        %v599 = vadd.f32 %v598, %v324
        %v600 = vadd.f32 %v599, %v325
        %v601 = vadd.f32 %v600, %v326
        %v602 = vadd.f32 %v601, %v327
        %v603 = vadd.f32 %v602, %v328
        %v604 = vadd.f32 %v603, %v329
        %v605 = vadd.f32 %v604, %v330
        %v606 = vadd.f32 %v605, %v331
        %v607 = vadd.f32 %v606, %v332
        %v608 = vrot.slane %v607, 4
        %v609 = vadd.f32 %v607, %v608
        %v610 = vrot.slane %v609, 2
        %v611 = vadd.f32 %v609, %v610
        %v612 = vrot.slane %v611, 1
        %v613 = vadd.f32 %v611, %v612
        %v614 = vadd.f32 %v333, %v334
        %v615 = vadd.f32 %v614, %v335
        %v616 = vadd.f32 %v615, %v336
        %v617 = vadd.f32 %v616, %v337
        %v618 = vadd.f32 %v617, %v338
        %v619 = vadd.f32 %v618, %v339
        %v620 = vadd.f32 %v619, %v340
        %v621 = vadd.f32 %v620, %v341
        %v622 = vadd.f32 %v621, %v342
        %v623 = vadd.f32 %v622, %v343
        %v624 = vadd.f32 %v623, %v344
        %v625 = vadd.f32 %v624, %v345
        %v626 = vadd.f32 %v625, %v346
        %v627 = vadd.f32 %v626, %v347
        %v628 = vadd.f32 %v627, %v348
        %v629 = vadd.f32 %v628, %v349
        %v630 = vadd.f32 %v629, %v350
        %v631 = vadd.f32 %v630, %v351
        %v632 = vadd.f32 %v631, %v352
        %v633 = vadd.f32 %v632, %v353
        %v634 = vadd.f32 %v633, %v354
        %v635 = vadd.f32 %v634, %v355
        %v636 = vadd.f32 %v635, %v356
        %v637 = vadd.f32 %v636, %v357
        %v638 = vadd.f32 %v637, %v358
        %v639 = vadd.f32 %v638, %v359
        %v640 = vadd.f32 %v639, %v360
        %v641 = vadd.f32 %v640, %v361
        %v642 = vadd.f32 %v641, %v362
        %v643 = vadd.f32 %v642, %v363
        %v644 = vadd.f32 %v643, %v364
        %v645 = vrot.slane %v644, 4
        %v646 = vadd.f32 %v644, %v645
        %v647 = vrot.slane %v646, 2
        %v648 = vadd.f32 %v646, %v647
        %v649 = vrot.slane %v648, 1
        %v650 = vadd.f32 %v648, %v649
        %v651 = vadd.f32 %v365, %v366
        %v652 = vadd.f32 %v651, %v367
        %v653 = vadd.f32 %v652, %v368
        %v654 = vadd.f32 %v653, %v369
        %v655 = vadd.f32 %v654, %v370
        %v656 = vadd.f32 %v655, %v371
        %v657 = vadd.f32 %v656, %v372
        %v658 = vadd.f32 %v657, %v373
        %v659 = vadd.f32 %v658, %v374
        %v660 = vadd.f32 %v659, %v375
        %v661 = vadd.f32 %v660, %v376
        %v662 = vadd.f32 %v661, %v377
        %v663 = vadd.f32 %v662, %v378
        %v664 = vadd.f32 %v663, %v379
        %v665 = vadd.f32 %v664, %v380
        %v666 = vadd.f32 %v665, %v381
        %v667 = vadd.f32 %v666, %v382
        %v668 = vadd.f32 %v667, %v383
        %v669 = vadd.f32 %v668, %v384
        %v670 = vadd.f32 %v669, %v385
        %v671 = vadd.f32 %v670, %v386
        %v672 = vadd.f32 %v671, %v387
        %v673 = vadd.f32 %v672, %v388
        %v674 = vadd.f32 %v673, %v389
        %v675 = vadd.f32 %v674, %v390
        %v676 = vadd.f32 %v675, %v391
        %v677 = vadd.f32 %v676, %v392
        %v678 = vadd.f32 %v677, %v393
        %v679 = vadd.f32 %v678, %v394
        %v680 = vadd.f32 %v679, %v395
        %v681 = vadd.f32 %v680, %v396
        %v682 = vrot.slane %v681, 4
        %v683 = vadd.f32 %v681, %v682
        %v684 = vrot.slane %v683, 2
        %v685 = vadd.f32 %v683, %v684
        %v686 = vrot.slane %v685, 1
        %v687 = vadd.f32 %v685, %v686
        %v688 = vadd.f32 %v397, %v398
        %v689 = vadd.f32 %v688, %v399
        %v690 = vadd.f32 %v689, %v400
        %v691 = vadd.f32 %v690, %v401
        %v692 = vadd.f32 %v691, %v402
        %v693 = vadd.f32 %v692, %v403
        %v694 = vadd.f32 %v693, %v404
        %v695 = vadd.f32 %v694, %v405
        %v696 = vadd.f32 %v695, %v406
        %v697 = vadd.f32 %v696, %v407
        %v698 = vadd.f32 %v697, %v408
        %v699 = vadd.f32 %v698, %v409
        %v700 = vadd.f32 %v699, %v410
        %v701 = vadd.f32 %v700, %v411
        %v702 = vadd.f32 %v701, %v412
        %v703 = vadd.f32 %v702, %v413
        %v704 = vadd.f32 %v703, %v414
        %v705 = vadd.f32 %v704, %v415
        %v706 = vadd.f32 %v705, %v416
        %v707 = vadd.f32 %v706, %v417
        %v708 = vadd.f32 %v707, %v418
        %v709 = vadd.f32 %v708, %v419
        %v710 = vadd.f32 %v709, %v420
        %v711 = vadd.f32 %v710, %v421
        %v712 = vadd.f32 %v711, %v422
        %v713 = vadd.f32 %v712, %v423
        %v714 = vadd.f32 %v713, %v424
        %v715 = vadd.f32 %v714, %v425
        %v716 = vadd.f32 %v715, %v426
        %v717 = vadd.f32 %v716, %v427
        %v718 = vadd.f32 %v717, %v428
        %v719 = vrot.slane %v718, 4
        %v720 = vadd.f32 %v718, %v719
        %v721 = vrot.slane %v720, 2
        %v722 = vadd.f32 %v720, %v721
        %v723 = vrot.slane %v722, 1
        %v724 = vadd.f32 %v722, %v723
        %vm733 = vcmask 1041409
        %v734 = vsel %vm733, %v502, %v465
        %vm735 = vcmask 1042434
        %v736 = vsel %vm735, %v539, %v734
        %vm737 = vcmask 1043459
        %v738 = vsel %vm737, %v576, %v736
        %vm739 = vcmask 1044484
        %v740 = vsel %vm739, %v613, %v738
        %vm741 = vcmask 1045509
        %v742 = vsel %vm741, %v650, %v740
        %vm743 = vcmask 1046534
        %v744 = vsel %vm743, %v687, %v742
        %vm745 = vcmask 1047559
        %v746 = vsel %vm745, %v724, %v744
        %v748 = vadd.f32 %v172, %v746
        %749 = vst [vmem:[#allocation2] sm:$0xff] %v748
        // Predicated region
        $region33: #{tpu_custom_call.1} parent=23 // pred_check
          %p750 = pneg %p167
        $region34: #{tpu_custom_call.1} parent=23 // pred_check_branch
          %752 = sbr.rel (%p750) target = $region36
        $region35: #{tpu_custom_call.1} parent=23 // pred_region
          %v753 = vld [vmem:[#allocation2] sm:$0xff]
          %v754 = vmul.f32 %v753, 0.00390625
          %755 = vst [vmem:[%s164] sm:$0xff] %v754
        $region36: #{tpu_custom_call.1} parent=23 // pred_fallthru
          _
        %s756 = sand.u32 %s77, 1
        %s757 = scalar_lea.sflag [#allocation5], %s756
        %s758 = sand.u32 %s77, 1
        %s759 = smul.addr %s758, 8
        %s760 = scalar_lea.vmem [#allocation6], %s759
        // Predicated region
        $region37: #{tpu_custom_call.1} parent=23 // pred_check
          %p761 = pneg %p87
        $region38: #{tpu_custom_call.1} parent=23 // pred_check_branch
          %763 = sbr.rel (%p761) target = $region40
        $region39: #{tpu_custom_call.1} parent=23 // pred_region
          %s765 = ssub.s32 128, 128
          %766 = vsyncadd %s757, %s765
          %s767 = smul.addr %s23, 2
          %s768 = sadd.s32 %s24, %s767
          %s769 = smul.addr %s768, 128
          %s770 = scalar_lea.hbm %s1, %s769
          %s772 = sshll.u32 %s760, 4
          %s773 = int_to_ptr.vmem [resolvable:$true] %s772
          %775 = dma.vmem_to_hbm [thread:$0]  %s773, 128, %s770, %s757
        $region40: #{tpu_custom_call.1} parent=23 // pred_fallthru
          _
      $region24: #{tpu_custom_call.1} parent=5 // pred_fallthru
        _
      %p776 = scmp.le.s32.totalorder 2, %s13
      // Predicated region
      $region41: #{tpu_custom_call.1} parent=5 // pred_check
        %p777 = pneg %p776
      $region42: #{tpu_custom_call.1} parent=5 // pred_check_branch
        %779 = sbr.rel (%p777) target = $region44
      $region43: #{tpu_custom_call.1} parent=5 // pred_region
        %s780 = ssub.s32 %s13, 2
        // Predicated region
        $region45: #{tpu_custom_call.1} parent=43 // pred_check
          %p781 = pneg %p93
        $region46: #{tpu_custom_call.1} parent=43 // pred_check_branch
          %783 = sbr.rel (%p781) target = $region48
        $region47: #{tpu_custom_call.1} parent=43 // pred_region
          %s784 = sand.u32 %s78, 1
          %s785 = scalar_lea.sflag [#allocation5], %s784
          %s786 = sand.u32 %s78, 1
          %s787 = smul.addr %s786, 8
          %s788 = scalar_lea.vmem [#allocation6], %s787
          %789 = dma.done %s785, 128
        $region48: #{tpu_custom_call.1} parent=43 // pred_fallthru
          _
      $region44: #{tpu_custom_call.1} parent=5 // pred_fallthru
        _
    $region6: #{tpu_custom_call.1} parent=1 // loop_footer
      %s17 = sadd.s32 1, %s13
    $region7: #{tpu_custom_call.1} parent=1 // loop_footer_branch
      %12 = sbr.rel target = $region3
    $region8: #{tpu_custom_call.1} parent=1 // loop_exit
      _
    %790 = vsyncpa [#allocation4], 1
    %s791 = scalar_lea.sflag [#allocation4], 1
    %792 = vsyncpa %s791, 1
    %793 = vsyncpa [#allocation5], 1
    %s794 = scalar_lea.sflag [#allocation5], 1
    %795 = vsyncpa %s794, 1

</llo_original>
